<compile_context>
chip_gen: v7x
topology: tpu7x:2x2x1
jax: 0.10.0
libtpu: 0.0.40
codegen_flags: <defaults>
</compile_context>

<pallas_src>
import functools
import math

import jax
import jax.numpy as jnp
from jax.experimental import pallas as pl
from jax.experimental.pallas import tpu as pltpu


_HALF_LOG_2PI = 0.5 * math.log(2.0 * math.pi)
_LANE = 128
_SUB = 8


# ----------------------------------------------------------------------------
# In-kernel special functions (Mosaic has no lgamma/digamma primitive).
# ----------------------------------------------------------------------------
def _lgamma_digamma(x):
    """(log Gamma(x), digamma(x)) for x >= 1 in f32.

    Shift-by-2 recurrence + truncated Stirling/asymptotic series (z = x+2 >= 3).
    Costs 2 logs + 2 approximate reciprocals on the EUP per pair; the rest is
    short Horner polynomials on the VPU.  Truncation error < ~6e-6 for x >= 1.
    """
    z = x + 2.0
    w = x * (x + 1.0)                       # Gamma(x+2) = x*(x+1)*Gamma(x)
    ln_z = jnp.log(z)
    ln_w = jnp.log(w)
    inv_z = pl.reciprocal(z, approx=True)
    inv_w = pl.reciprocal(w, approx=True)
    inv_z2 = inv_z * inv_z
    # lgamma(z) ~ (z-.5)ln z - z + .5 ln 2pi + 1/(12z) - 1/(360z^3)
    lg = ((z - 0.5) * ln_z - z + _HALF_LOG_2PI
          + inv_z * (1.0 / 12.0 - inv_z2 * (1.0 / 360.0))
          - ln_w)
    # digamma(z) ~ ln z - 1/(2z) - 1/(12z^2) + 1/(120z^4)
    dg = (ln_z
          - inv_z * (0.5 + inv_z * (1.0 / 12.0 - inv_z2 * (1.0 / 120.0)))
          - (2.0 * x + 1.0) * inv_w)        # -1/x - 1/(x+1) collapsed to one divide
    return lg, dg


# ----------------------------------------------------------------------------
# Pallas kernel: per-pixel  loglikelihood_loss + coeff * dirichlet_kl_divergence
# ----------------------------------------------------------------------------
def _evidence_loss_kernel(coeff_ref, a_ref, t_ref, out_ref, *,
                          num_classes, hw, pixels_per_tile, masked,
                          reduce_in_kernel):
    """a_ref: (C, rows, 128) f32, t_ref: (rows, 128) i32, out_ref: (rows, 128) f32."""
    C = num_classes
    t = t_ref[...]
    zero = jnp.zeros(t.shape, jnp.float32)

    # ---- single fused pass over classes (each alpha plane read once). ----
    s = zero          # sum_c alpha_c
    ssq = zero        # sum_c alpha_c^2
    a_true = zero     # alpha of the target class
    sum_lg = zero     # sum_c lgamma(alpha_hat_c)
    sum_dg = zero     # sum_c (alpha_hat_c - 1) * digamma(alpha_hat_c)
    for c in range(C):
        a_c = a_ref[c]
        s = s + a_c
        ssq = ssq + a_c * a_c
        is_c = t == c
        a_true = jnp.where(is_c, a_c, a_true)
        a_hat = jnp.where(is_c, 1.0, a_c)             # alpha_hat_for_kl
        lg_c, dg_c = _lgamma_digamma(a_hat)
        sum_lg = sum_lg + lg_c
        sum_dg = sum_dg + (a_hat - 1.0) * dg_c

    # ---- cross-class terms (a handful of VPU ops + 2 approx reciprocals). ----
    inv_s = pl.reciprocal(s, approx=True)
    q = ssq * (inv_s * inv_s)
    # one-hot y:  sum_c (y_c - a_c/S)^2 = 1 - 2*a_true/S + ssq/S^2
    ll_err = 1.0 - 2.0 * a_true * inv_s + q
    # sum_c a_c*(S - a_c) / (S^2*(S+1)) = (1 - ssq/S^2) / (S+1)
    ll_var = (1.0 - q) * pl.reciprocal(s + 1.0, approx=True)

    s_hat = s - a_true + 1.0                           # sum_c alpha_hat_c
    lg_s_hat, dg_s_hat = _lgamma_digamma(s_hat)
    # KL(Dir(alpha_hat) || Dir(1,...,1))
    kl = (sum_dg - (s_hat - float(C)) * dg_s_hat
          + lg_s_hat - sum_lg - math.lgamma(float(C)))

    loss = ll_err + ll_var + coeff_ref[0] * kl

    if masked:
        # Zero padded-tail pixels (only compiled when padding exists).
        row_i = jax.lax.broadcasted_iota(jnp.int32, loss.shape, 0)
        lane_i = jax.lax.broadcasted_iota(jnp.int32, loss.shape, 1)
        idx = pl.program_id(1) * pixels_per_tile + row_i * _LANE + lane_i
        loss = jnp.where(idx < hw, loss, 0.0)

    if reduce_in_kernel:
        # Accumulate per-batch partial-sum tile; tile axis is "arbitrary" and the
        # output block index is constant along it (standard accumulator pattern).
        @pl.when(pl.program_id(1) == 0)
        def _init():
            out_ref[...] = jnp.zeros_like(out_ref)
        out_ref[...] += loss
    else:
        out_ref[...] = loss


# ----------------------------------------------------------------------------
# Tiling selection
# ----------------------------------------------------------------------------
def _pick_tiling(HW, B, C, max_rows=512):
    """Pick (rows_per_tile, padded_row_count) for the (rows, 128) pixel tiles."""
    R = -(-HW // _LANE)                                # ceil(H*W / 128)
    # Keep double-buffered (alphas + targets + out) blocks <= ~12 MiB so they fit
    # the scoped-VMEM default on every generation (16 MiB v5e, 32 MiB v6e/v7x).
    bytes_per_row = (C + 2) * _LANE * 4
    vmem_rows = max(_SUB, ((12 << 20) // (2 * bytes_per_row)) // _SUB * _SUB)
    max_rows = max(_SUB, (min(max_rows, vmem_rows) // _SUB) * _SUB)

    if R <= max_rows:
        rows, R_pad = R, R                             # block == full dims, no padding
        # Give v7x's 2 TensorCores >= 2 grid steps when it costs no padding.
        if B == 1 and R >= 16 and R % 16 == 0:
            rows = R // 2
        return rows, R_pad

    # Multi-tile: rows must be a multiple of 8 and divide the (possibly padded) R.
    R8 = -(-R // _SUB) * _SUB
    for rows in range(max_rows, max(_SUB, max_rows // 2) - 1, -_SUB):
        if R8 % rows == 0:
            return rows, R8
    rows = max_rows
    return rows, -(-R // rows) * rows


# ----------------------------------------------------------------------------
# Wrapper
# ----------------------------------------------------------------------------
def log_likelihood_evidence_loss(alphas, targets, epoch, *, num_classes,
                                 annealing_factor=10, reduce_mean=True,
                                 max_rows_per_tile=512):
    """JAX/Pallas equivalent of LogLikelihoodEvidenceLoss.forward.

    alphas: (B, C, H, W) Dirichlet parameters (>= 1), targets: (B, H, W) int
    class labels in [0, C), epoch: python number.
    """
    # TODO(synk): only the default hard-integer-label one_hot_encode path is
    # implemented (soft_binarize / hard_binarize variants are not).
    B, C, H, W = alphas.shape
    assert C == num_classes
    HW = H * W

    a = alphas.astype(jnp.float32).reshape(B, C, HW)   # free row-major reshape
    t = targets.astype(jnp.int32).reshape(B, HW)

    rows, R_pad = _pick_tiling(HW, B, C, max_rows_per_tile)
    pad = R_pad * _LANE - HW
    if pad:
        # TODO(synk): ragged tail still pays one jnp.pad HBM pass; a masked
        # partial-last-tile DMA would avoid it.  Pad values are benign (masked
        # in-kernel for the mean path, sliced off for the per-pixel path).
        a = jnp.pad(a, ((0, 0), (0, 0), (0, pad)), constant_values=1.0)
        t = jnp.pad(t, ((0, 0), (0, pad)), constant_values=0)
    a = a.reshape(B, C, R_pad, _LANE)
    t = t.reshape(B, R_pad, _LANE)
    num_tiles = R_pad // rows

    coeff = jnp.array([min(1.0, float(epoch) / float(annealing_factor))],
                      dtype=jnp.float32)

    kernel = functools.partial(
        _evidence_loss_kernel, num_classes=C, hw=HW,
        pixels_per_tile=rows * _LANE, masked=(pad > 0),
        reduce_in_kernel=reduce_mean)

    if reduce_mean:
        # One (rows,128) partial-sum tile per batch; full mean finishes in JAX.
        out_shape = jax.ShapeDtypeStruct((B, rows, _LANE), jnp.float32)
        out_spec = pl.BlockSpec((pl.Squeezed(), rows, _LANE),
                                lambda b, i, _c: (b, 0, 0))
        semantics = ("parallel", "arbitrary")
    else:
        out_shape = jax.ShapeDtypeStruct((B, R_pad, _LANE), jnp.float32)
        out_spec = pl.BlockSpec((pl.Squeezed(), rows, _LANE),
                                lambda b, i, _c: (b, i, 0))
        semantics = ("parallel", "parallel")

    out = pl.pallas_call(
        kernel,
        out_shape=out_shape,
        grid_spec=pltpu.PrefetchScalarGridSpec(
            num_scalar_prefetch=1,                     # annealing coefficient (SMEM)
            grid=(B, num_tiles),
            in_specs=[
                pl.BlockSpec((pl.Squeezed(), C, rows, _LANE),
                             lambda b, i, _c: (b, 0, i, 0)),
                pl.BlockSpec((pl.Squeezed(), rows, _LANE),
                             lambda b, i, _c: (b, i, 0)),
            ],
            out_specs=out_spec,
        ),
        compiler_params=pltpu.CompilerParams(dimension_semantics=semantics),
    )(coeff, a, t)

    if reduce_mean:
        # mean(ll) + coeff * mean(kl) == mean(ll + coeff * kl)
        return jnp.sum(out) / jnp.float32(B * HW)
    per_pixel = out.reshape(B, R_pad * _LANE)[:, :HW]
    return per_pixel.reshape(B, 1, H, W)


# ----------------------------------------------------------------------------
# Pure-JAX reference (same math, standard EDL formulas) for verification.
# ----------------------------------------------------------------------------
def _reference(alphas, targets, epoch, *, num_classes, annealing_factor,
               reduce_mean=True):
    from jax.scipy.special import gammaln, digamma
    y = jax.nn.one_hot(targets, num_classes, axis=1, dtype=jnp.float32)
    alphas = alphas.astype(jnp.float32)
    s = jnp.sum(alphas, axis=1, keepdims=True)
    ll = (jnp.sum((y - alphas / s) ** 2, axis=1, keepdims=True)
          + jnp.sum(alphas * (s - alphas) / (s * s * (s + 1.0)),
                    axis=1, keepdims=True))
    a_hat = (alphas - 1.0) * (1.0 - y) + 1.0
    s_hat = jnp.sum(a_hat, axis=1, keepdims=True)
    ln_b = gammaln(s_hat) - jnp.sum(gammaln(a_hat), axis=1, keepdims=True)
    ln_b_uni = -gammaln(jnp.float32(num_classes))
    kl = (jnp.sum((a_hat - 1.0) * (digamma(a_hat) - digamma(s_hat)),
                  axis=1, keepdims=True) + ln_b + ln_b_uni)
    coeff = min(1.0, float(epoch) / float(annealing_factor))
    if reduce_mean:
        return jnp.mean(ll) + coeff * jnp.mean(kl)
    return ll + coeff * kl


if __name__ == "__main__":
    import numpy as np

    key = jax.random.PRNGKey(0)

    def make_inputs(B, C, H, W, tag):
        k1, k2 = jax.random.split(jax.random.fold_in(key, tag))
        evidence = jax.nn.softplus(
            jax.random.normal(k1, (B, C, H, W), dtype=jnp.float32))
        alphas = evidence + 1.0                        # alphas >= 1 (standard EDL)
        targets = jax.random.randint(k2, (B, H, W), 0, C, dtype=jnp.int32)
        return alphas, targets

    # --- Case 1: B=2, C=4, 16x16 -- single tile, no padding. ---
    alphas, targets = make_inputs(2, 4, 16, 16, tag=0)
    epoch = 3
    out = jax.block_until_ready(log_likelihood_evidence_loss(
        alphas, targets, epoch, num_classes=4, annealing_factor=10,
        reduce_mean=True))
    ref = jax.block_until_ready(_reference(
        alphas, targets, epoch, num_classes=4, annealing_factor=10))
    assert np.isfinite(float(out)), "kernel produced non-finite loss"
    assert np.allclose(float(out), float(ref), rtol=2e-2, atol=2e-2), (
        float(out), float(ref))

    # per-pixel (reduce_mean=False) path
    pp = jax.block_until_ready(log_likelihood_evidence_loss(
        alphas, targets, epoch, num_classes=4, annealing_factor=10,
        reduce_mean=False))
    pp_ref = jax.block_until_ready(_reference(
        alphas, targets, epoch, num_classes=4, annealing_factor=10,
        reduce_mean=False))
    assert pp.shape == pp_ref.shape
    assert np.allclose(np.asarray(pp), np.asarray(pp_ref),
                       rtol=2e-2, atol=2e-2)

    # --- Case 2: B=2, C=3, 48x48 with a tiny forced tile -- exercises the
    #     multi-tile accumulator, padded tail, and in-kernel masking. ---
    alphas2, targets2 = make_inputs(2, 3, 48, 48, tag=1)
    out2 = jax.block_until_ready(log_likelihood_evidence_loss(
        alphas2, targets2, 7, num_classes=3, annealing_factor=10,
        reduce_mean=True, max_rows_per_tile=8))
    ref2 = jax.block_until_ready(_reference(
        alphas2, targets2, 7, num_classes=3, annealing_factor=10))
    assert np.isfinite(float(out2))
    assert np.allclose(float(out2), float(ref2), rtol=2e-2, atol=2e-2), (
        float(out2), float(ref2))

    print("KERNEL_OK")
</pallas_src>

<mosaic_0001>
module attributes {stable_mosaic.version = 11 : i64} {
  func.func @_evidence_loss_kernel(%arg0: i32, %arg1: i32, %arg2: memref<1xf32, #tpu.memory_space<smem>>, %arg3: memref<1x4x2x128xf32, #tpu.memory_space<vmem>>, %arg4: memref<1x2x128xi32, #tpu.memory_space<vmem>>, %arg5: memref<1x2x128xf32, #tpu.memory_space<vmem>>) attributes {dimension_semantics = [#tpu.dimension_semantics<parallel>, #tpu.dimension_semantics<arbitrary>], iteration_bounds = array<i64: 2, 1>, scalar_prefetch = 1 : i64, scratch_operands = 0 : i64, tpu.core_type = #tpu.core_type<tc>, window_params = [{transform_indices = @transform_0, window_bounds = array<i64: 1, 4, 2, 128>}, {transform_indices = @transform_1, window_bounds = array<i64: 1, 2, 128>}, {transform_indices = @transform_2, window_bounds = array<i64: 1, 2, 128>}]} {
    %c0 = arith.constant 0 : index
    %c0_0 = arith.constant 0 : index
    %c0_1 = arith.constant 0 : index
    %0 = vector.load %arg4[%c0, %c0_0, %c0_1] : memref<1x2x128xi32, #tpu.memory_space<vmem>>, vector<1x2x128xi32>
    %1 = vector.shape_cast %0 : vector<1x2x128xi32> to vector<2x128xi32>
    %cst = arith.constant 0.000000e+00 : f32
    %2 = vector.broadcast %cst : f32 to vector<2x128xf32>
    %c0_2 = arith.constant 0 : index
    %c0_3 = arith.constant 0 : index
    %c0_4 = arith.constant 0 : index
    %c0_5 = arith.constant 0 : index
    %3 = vector.load %arg3[%c0_2, %c0_3, %c0_4, %c0_5] : memref<1x4x2x128xf32, #tpu.memory_space<vmem>>, vector<1x1x2x128xf32>
    %4 = vector.shape_cast %3 : vector<1x1x2x128xf32> to vector<2x128xf32>
    %5 = arith.addf %2, %4 : vector<2x128xf32>
    %6 = arith.mulf %4, %4 : vector<2x128xf32>
    %7 = arith.addf %2, %6 : vector<2x128xf32>
    %c0_i32 = arith.constant 0 : i32
    %8 = vector.broadcast %c0_i32 : i32 to vector<2x128xi32>
    %9 = arith.cmpi eq, %1, %8 : vector<2x128xi32>
    %10 = arith.select %9, %4, %2 : vector<2x128xi1>, vector<2x128xf32>
    %cst_6 = arith.constant 1.000000e+00 : f32
    %11 = vector.broadcast %cst_6 : f32 to vector<2x128xf32>
    %12 = arith.select %9, %11, %4 : vector<2x128xi1>, vector<2x128xf32>
    %cst_7 = arith.constant 2.000000e+00 : f32
    %13 = vector.broadcast %cst_7 : f32 to vector<2x128xf32>
    %14 = arith.addf %12, %13 : vector<2x128xf32>
    %cst_8 = arith.constant 1.000000e+00 : f32
    %15 = vector.broadcast %cst_8 : f32 to vector<2x128xf32>
    %16 = arith.addf %12, %15 : vector<2x128xf32>
    %17 = arith.mulf %12, %16 : vector<2x128xf32>
    %18 = math.log %14 : vector<2x128xf32>
    %19 = math.log %17 : vector<2x128xf32>
    %20 = tpu.reciprocal %14 {approx = true} : vector<2x128xf32> -> vector<2x128xf32>
    %21 = tpu.reciprocal %17 {approx = true} : vector<2x128xf32> -> vector<2x128xf32>
    %22 = arith.mulf %20, %20 : vector<2x128xf32>
    %cst_9 = arith.constant 5.000000e-01 : f32
    %23 = vector.broadcast %cst_9 : f32 to vector<2x128xf32>
    %24 = arith.subf %14, %23 : vector<2x128xf32>
    %25 = arith.mulf %24, %18 : vector<2x128xf32>
    %26 = arith.subf %25, %14 : vector<2x128xf32>
    %cst_10 = arith.constant 0.918938517 : f32
    %27 = vector.broadcast %cst_10 : f32 to vector<2x128xf32>
    %28 = arith.addf %26, %27 : vector<2x128xf32>
    %cst_11 = arith.constant 0.00277777785 : f32
    %29 = vector.broadcast %cst_11 : f32 to vector<2x128xf32>
    %30 = arith.mulf %22, %29 : vector<2x128xf32>
    %cst_12 = arith.constant 0.0833333358 : f32
    %31 = vector.broadcast %cst_12 : f32 to vector<2x128xf32>
    %32 = arith.subf %31, %30 : vector<2x128xf32>
    %33 = arith.mulf %20, %32 : vector<2x128xf32>
    %34 = arith.addf %28, %33 : vector<2x128xf32>
    %35 = arith.subf %34, %19 : vector<2x128xf32>
    %cst_13 = arith.constant 0.00833333377 : f32
    %36 = vector.broadcast %cst_13 : f32 to vector<2x128xf32>
    %37 = arith.mulf %22, %36 : vector<2x128xf32>
    %cst_14 = arith.constant 0.0833333358 : f32
    %38 = vector.broadcast %cst_14 : f32 to vector<2x128xf32>
    %39 = arith.subf %38, %37 : vector<2x128xf32>
    %40 = arith.mulf %20, %39 : vector<2x128xf32>
    %cst_15 = arith.constant 5.000000e-01 : f32
    %41 = vector.broadcast %cst_15 : f32 to vector<2x128xf32>
    %42 = arith.addf %41, %40 : vector<2x128xf32>
    %43 = arith.mulf %20, %42 : vector<2x128xf32>
    %44 = arith.subf %18, %43 : vector<2x128xf32>
    %cst_16 = arith.constant 2.000000e+00 : f32
    %45 = vector.broadcast %cst_16 : f32 to vector<2x128xf32>
    %46 = arith.mulf %45, %12 : vector<2x128xf32>
    %cst_17 = arith.constant 1.000000e+00 : f32
    %47 = vector.broadcast %cst_17 : f32 to vector<2x128xf32>
    %48 = arith.addf %46, %47 : vector<2x128xf32>
    %49 = arith.mulf %48, %21 : vector<2x128xf32>
    %50 = arith.subf %44, %49 : vector<2x128xf32>
    %51 = arith.addf %2, %35 : vector<2x128xf32>
    %cst_18 = arith.constant 1.000000e+00 : f32
    %52 = vector.broadcast %cst_18 : f32 to vector<2x128xf32>
    %53 = arith.subf %12, %52 : vector<2x128xf32>
    %54 = arith.mulf %53, %50 : vector<2x128xf32>
    %55 = arith.addf %2, %54 : vector<2x128xf32>
    %c0_19 = arith.constant 0 : index
    %c1 = arith.constant 1 : index
    %c0_20 = arith.constant 0 : index
    %c0_21 = arith.constant 0 : index
    %56 = vector.load %arg3[%c0_19, %c1, %c0_20, %c0_21] : memref<1x4x2x128xf32, #tpu.memory_space<vmem>>, vector<1x1x2x128xf32>
    %57 = vector.shape_cast %56 : vector<1x1x2x128xf32> to vector<2x128xf32>
    %58 = arith.addf %5, %57 : vector<2x128xf32>
    %59 = arith.mulf %57, %57 : vector<2x128xf32>
    %60 = arith.addf %7, %59 : vector<2x128xf32>
    %c1_i32 = arith.constant 1 : i32
    %61 = vector.broadcast %c1_i32 : i32 to vector<2x128xi32>
    %62 = arith.cmpi eq, %1, %61 : vector<2x128xi32>
    %63 = arith.select %62, %57, %10 : vector<2x128xi1>, vector<2x128xf32>
    %cst_22 = arith.constant 1.000000e+00 : f32
    %64 = vector.broadcast %cst_22 : f32 to vector<2x128xf32>
    %65 = arith.select %62, %64, %57 : vector<2x128xi1>, vector<2x128xf32>
    %cst_23 = arith.constant 2.000000e+00 : f32
    %66 = vector.broadcast %cst_23 : f32 to vector<2x128xf32>
    %67 = arith.addf %65, %66 : vector<2x128xf32>
    %cst_24 = arith.constant 1.000000e+00 : f32
    %68 = vector.broadcast %cst_24 : f32 to vector<2x128xf32>
    %69 = arith.addf %65, %68 : vector<2x128xf32>
    %70 = arith.mulf %65, %69 : vector<2x128xf32>
    %71 = math.log %67 : vector<2x128xf32>
    %72 = math.log %70 : vector<2x128xf32>
    %73 = tpu.reciprocal %67 {approx = true} : vector<2x128xf32> -> vector<2x128xf32>
    %74 = tpu.reciprocal %70 {approx = true} : vector<2x128xf32> -> vector<2x128xf32>
    %75 = arith.mulf %73, %73 : vector<2x128xf32>
    %cst_25 = arith.constant 5.000000e-01 : f32
    %76 = vector.broadcast %cst_25 : f32 to vector<2x128xf32>
    %77 = arith.subf %67, %76 : vector<2x128xf32>
    %78 = arith.mulf %77, %71 : vector<2x128xf32>
    %79 = arith.subf %78, %67 : vector<2x128xf32>
    %cst_26 = arith.constant 0.918938517 : f32
    %80 = vector.broadcast %cst_26 : f32 to vector<2x128xf32>
    %81 = arith.addf %79, %80 : vector<2x128xf32>
    %cst_27 = arith.constant 0.00277777785 : f32
    %82 = vector.broadcast %cst_27 : f32 to vector<2x128xf32>
    %83 = arith.mulf %75, %82 : vector<2x128xf32>
    %cst_28 = arith.constant 0.0833333358 : f32
    %84 = vector.broadcast %cst_28 : f32 to vector<2x128xf32>
    %85 = arith.subf %84, %83 : vector<2x128xf32>
    %86 = arith.mulf %73, %85 : vector<2x128xf32>
    %87 = arith.addf %81, %86 : vector<2x128xf32>
    %88 = arith.subf %87, %72 : vector<2x128xf32>
    %cst_29 = arith.constant 0.00833333377 : f32
    %89 = vector.broadcast %cst_29 : f32 to vector<2x128xf32>
    %90 = arith.mulf %75, %89 : vector<2x128xf32>
    %cst_30 = arith.constant 0.0833333358 : f32
    %91 = vector.broadcast %cst_30 : f32 to vector<2x128xf32>
    %92 = arith.subf %91, %90 : vector<2x128xf32>
    %93 = arith.mulf %73, %92 : vector<2x128xf32>
    %cst_31 = arith.constant 5.000000e-01 : f32
    %94 = vector.broadcast %cst_31 : f32 to vector<2x128xf32>
    %95 = arith.addf %94, %93 : vector<2x128xf32>
    %96 = arith.mulf %73, %95 : vector<2x128xf32>
    %97 = arith.subf %71, %96 : vector<2x128xf32>
    %cst_32 = arith.constant 2.000000e+00 : f32
    %98 = vector.broadcast %cst_32 : f32 to vector<2x128xf32>
    %99 = arith.mulf %98, %65 : vector<2x128xf32>
    %cst_33 = arith.constant 1.000000e+00 : f32
    %100 = vector.broadcast %cst_33 : f32 to vector<2x128xf32>
    %101 = arith.addf %99, %100 : vector<2x128xf32>
    %102 = arith.mulf %101, %74 : vector<2x128xf32>
    %103 = arith.subf %97, %102 : vector<2x128xf32>
    %104 = arith.addf %51, %88 : vector<2x128xf32>
    %cst_34 = arith.constant 1.000000e+00 : f32
    %105 = vector.broadcast %cst_34 : f32 to vector<2x128xf32>
    %106 = arith.subf %65, %105 : vector<2x128xf32>
    %107 = arith.mulf %106, %103 : vector<2x128xf32>
    %108 = arith.addf %55, %107 : vector<2x128xf32>
    %c0_35 = arith.constant 0 : index
    %c2 = arith.constant 2 : index
    %c0_36 = arith.constant 0 : index
    %c0_37 = arith.constant 0 : index
    %109 = vector.load %arg3[%c0_35, %c2, %c0_36, %c0_37] : memref<1x4x2x128xf32, #tpu.memory_space<vmem>>, vector<1x1x2x128xf32>
    %110 = vector.shape_cast %109 : vector<1x1x2x128xf32> to vector<2x128xf32>
    %111 = arith.addf %58, %110 : vector<2x128xf32>
    %112 = arith.mulf %110, %110 : vector<2x128xf32>
    %113 = arith.addf %60, %112 : vector<2x128xf32>
    %c2_i32 = arith.constant 2 : i32
    %114 = vector.broadcast %c2_i32 : i32 to vector<2x128xi32>
    %115 = arith.cmpi eq, %1, %114 : vector<2x128xi32>
    %116 = arith.select %115, %110, %63 : vector<2x128xi1>, vector<2x128xf32>
    %cst_38 = arith.constant 1.000000e+00 : f32
    %117 = vector.broadcast %cst_38 : f32 to vector<2x128xf32>
    %118 = arith.select %115, %117, %110 : vector<2x128xi1>, vector<2x128xf32>
    %cst_39 = arith.constant 2.000000e+00 : f32
    %119 = vector.broadcast %cst_39 : f32 to vector<2x128xf32>
    %120 = arith.addf %118, %119 : vector<2x128xf32>
    %cst_40 = arith.constant 1.000000e+00 : f32
    %121 = vector.broadcast %cst_40 : f32 to vector<2x128xf32>
    %122 = arith.addf %118, %121 : vector<2x128xf32>
    %123 = arith.mulf %118, %122 : vector<2x128xf32>
    %124 = math.log %120 : vector<2x128xf32>
    %125 = math.log %123 : vector<2x128xf32>
    %126 = tpu.reciprocal %120 {approx = true} : vector<2x128xf32> -> vector<2x128xf32>
    %127 = tpu.reciprocal %123 {approx = true} : vector<2x128xf32> -> vector<2x128xf32>
    %128 = arith.mulf %126, %126 : vector<2x128xf32>
    %cst_41 = arith.constant 5.000000e-01 : f32
    %129 = vector.broadcast %cst_41 : f32 to vector<2x128xf32>
    %130 = arith.subf %120, %129 : vector<2x128xf32>
    %131 = arith.mulf %130, %124 : vector<2x128xf32>
    %132 = arith.subf %131, %120 : vector<2x128xf32>
    %cst_42 = arith.constant 0.918938517 : f32
    %133 = vector.broadcast %cst_42 : f32 to vector<2x128xf32>
    %134 = arith.addf %132, %133 : vector<2x128xf32>
    %cst_43 = arith.constant 0.00277777785 : f32
    %135 = vector.broadcast %cst_43 : f32 to vector<2x128xf32>
    %136 = arith.mulf %128, %135 : vector<2x128xf32>
    %cst_44 = arith.constant 0.0833333358 : f32
    %137 = vector.broadcast %cst_44 : f32 to vector<2x128xf32>
    %138 = arith.subf %137, %136 : vector<2x128xf32>
    %139 = arith.mulf %126, %138 : vector<2x128xf32>
    %140 = arith.addf %134, %139 : vector<2x128xf32>
    %141 = arith.subf %140, %125 : vector<2x128xf32>
    %cst_45 = arith.constant 0.00833333377 : f32
    %142 = vector.broadcast %cst_45 : f32 to vector<2x128xf32>
    %143 = arith.mulf %128, %142 : vector<2x128xf32>
    %cst_46 = arith.constant 0.0833333358 : f32
    %144 = vector.broadcast %cst_46 : f32 to vector<2x128xf32>
    %145 = arith.subf %144, %143 : vector<2x128xf32>
    %146 = arith.mulf %126, %145 : vector<2x128xf32>
    %cst_47 = arith.constant 5.000000e-01 : f32
    %147 = vector.broadcast %cst_47 : f32 to vector<2x128xf32>
    %148 = arith.addf %147, %146 : vector<2x128xf32>
    %149 = arith.mulf %126, %148 : vector<2x128xf32>
    %150 = arith.subf %124, %149 : vector<2x128xf32>
    %cst_48 = arith.constant 2.000000e+00 : f32
    %151 = vector.broadcast %cst_48 : f32 to vector<2x128xf32>
    %152 = arith.mulf %151, %118 : vector<2x128xf32>
    %cst_49 = arith.constant 1.000000e+00 : f32
    %153 = vector.broadcast %cst_49 : f32 to vector<2x128xf32>
    %154 = arith.addf %152, %153 : vector<2x128xf32>
    %155 = arith.mulf %154, %127 : vector<2x128xf32>
    %156 = arith.subf %150, %155 : vector<2x128xf32>
    %157 = arith.addf %104, %141 : vector<2x128xf32>
    %cst_50 = arith.constant 1.000000e+00 : f32
    %158 = vector.broadcast %cst_50 : f32 to vector<2x128xf32>
    %159 = arith.subf %118, %158 : vector<2x128xf32>
    %160 = arith.mulf %159, %156 : vector<2x128xf32>
    %161 = arith.addf %108, %160 : vector<2x128xf32>
    %c0_51 = arith.constant 0 : index
    %c3 = arith.constant 3 : index
    %c0_52 = arith.constant 0 : index
    %c0_53 = arith.constant 0 : index
    %162 = vector.load %arg3[%c0_51, %c3, %c0_52, %c0_53] : memref<1x4x2x128xf32, #tpu.memory_space<vmem>>, vector<1x1x2x128xf32>
    %163 = vector.shape_cast %162 : vector<1x1x2x128xf32> to vector<2x128xf32>
    %164 = arith.addf %111, %163 : vector<2x128xf32>
    %165 = arith.mulf %163, %163 : vector<2x128xf32>
    %166 = arith.addf %113, %165 : vector<2x128xf32>
    %c3_i32 = arith.constant 3 : i32
    %167 = vector.broadcast %c3_i32 : i32 to vector<2x128xi32>
    %168 = arith.cmpi eq, %1, %167 : vector<2x128xi32>
    %169 = arith.select %168, %163, %116 : vector<2x128xi1>, vector<2x128xf32>
    %cst_54 = arith.constant 1.000000e+00 : f32
    %170 = vector.broadcast %cst_54 : f32 to vector<2x128xf32>
    %171 = arith.select %168, %170, %163 : vector<2x128xi1>, vector<2x128xf32>
    %cst_55 = arith.constant 2.000000e+00 : f32
    %172 = vector.broadcast %cst_55 : f32 to vector<2x128xf32>
    %173 = arith.addf %171, %172 : vector<2x128xf32>
    %cst_56 = arith.constant 1.000000e+00 : f32
    %174 = vector.broadcast %cst_56 : f32 to vector<2x128xf32>
    %175 = arith.addf %171, %174 : vector<2x128xf32>
    %176 = arith.mulf %171, %175 : vector<2x128xf32>
    %177 = math.log %173 : vector<2x128xf32>
    %178 = math.log %176 : vector<2x128xf32>
    %179 = tpu.reciprocal %173 {approx = true} : vector<2x128xf32> -> vector<2x128xf32>
    %180 = tpu.reciprocal %176 {approx = true} : vector<2x128xf32> -> vector<2x128xf32>
    %181 = arith.mulf %179, %179 : vector<2x128xf32>
    %cst_57 = arith.constant 5.000000e-01 : f32
    %182 = vector.broadcast %cst_57 : f32 to vector<2x128xf32>
    %183 = arith.subf %173, %182 : vector<2x128xf32>
    %184 = arith.mulf %183, %177 : vector<2x128xf32>
    %185 = arith.subf %184, %173 : vector<2x128xf32>
    %cst_58 = arith.constant 0.918938517 : f32
    %186 = vector.broadcast %cst_58 : f32 to vector<2x128xf32>
    %187 = arith.addf %185, %186 : vector<2x128xf32>
    %cst_59 = arith.constant 0.00277777785 : f32
    %188 = vector.broadcast %cst_59 : f32 to vector<2x128xf32>
    %189 = arith.mulf %181, %188 : vector<2x128xf32>
    %cst_60 = arith.constant 0.0833333358 : f32
    %190 = vector.broadcast %cst_60 : f32 to vector<2x128xf32>
    %191 = arith.subf %190, %189 : vector<2x128xf32>
    %192 = arith.mulf %179, %191 : vector<2x128xf32>
    %193 = arith.addf %187, %192 : vector<2x128xf32>
    %194 = arith.subf %193, %178 : vector<2x128xf32>
    %cst_61 = arith.constant 0.00833333377 : f32
    %195 = vector.broadcast %cst_61 : f32 to vector<2x128xf32>
    %196 = arith.mulf %181, %195 : vector<2x128xf32>
    %cst_62 = arith.constant 0.0833333358 : f32
    %197 = vector.broadcast %cst_62 : f32 to vector<2x128xf32>
    %198 = arith.subf %197, %196 : vector<2x128xf32>
    %199 = arith.mulf %179, %198 : vector<2x128xf32>
    %cst_63 = arith.constant 5.000000e-01 : f32
    %200 = vector.broadcast %cst_63 : f32 to vector<2x128xf32>
    %201 = arith.addf %200, %199 : vector<2x128xf32>
    %202 = arith.mulf %179, %201 : vector<2x128xf32>
    %203 = arith.subf %177, %202 : vector<2x128xf32>
    %cst_64 = arith.constant 2.000000e+00 : f32
    %204 = vector.broadcast %cst_64 : f32 to vector<2x128xf32>
    %205 = arith.mulf %204, %171 : vector<2x128xf32>
    %cst_65 = arith.constant 1.000000e+00 : f32
    %206 = vector.broadcast %cst_65 : f32 to vector<2x128xf32>
    %207 = arith.addf %205, %206 : vector<2x128xf32>
    %208 = arith.mulf %207, %180 : vector<2x128xf32>
    %209 = arith.subf %203, %208 : vector<2x128xf32>
    %210 = arith.addf %157, %194 : vector<2x128xf32>
    %cst_66 = arith.constant 1.000000e+00 : f32
    %211 = vector.broadcast %cst_66 : f32 to vector<2x128xf32>
    %212 = arith.subf %171, %211 : vector<2x128xf32>
    %213 = arith.mulf %212, %209 : vector<2x128xf32>
    %214 = arith.addf %161, %213 : vector<2x128xf32>
    %215 = tpu.reciprocal %164 {approx = true} : vector<2x128xf32> -> vector<2x128xf32>
    %216 = arith.mulf %215, %215 : vector<2x128xf32>
    %217 = arith.mulf %166, %216 : vector<2x128xf32>
    %cst_67 = arith.constant 2.000000e+00 : f32
    %218 = vector.broadcast %cst_67 : f32 to vector<2x128xf32>
    %219 = arith.mulf %218, %169 : vector<2x128xf32>
    %220 = arith.mulf %219, %215 : vector<2x128xf32>
    %cst_68 = arith.constant 1.000000e+00 : f32
    %221 = vector.broadcast %cst_68 : f32 to vector<2x128xf32>
    %222 = arith.subf %221, %220 : vector<2x128xf32>
    %223 = arith.addf %222, %217 : vector<2x128xf32>
    %cst_69 = arith.constant 1.000000e+00 : f32
    %224 = vector.broadcast %cst_69 : f32 to vector<2x128xf32>
    %225 = arith.subf %224, %217 : vector<2x128xf32>
    %cst_70 = arith.constant 1.000000e+00 : f32
    %226 = vector.broadcast %cst_70 : f32 to vector<2x128xf32>
    %227 = arith.addf %164, %226 : vector<2x128xf32>
    %228 = tpu.reciprocal %227 {approx = true} : vector<2x128xf32> -> vector<2x128xf32>
    %229 = arith.mulf %225, %228 : vector<2x128xf32>
    %230 = arith.subf %164, %169 : vector<2x128xf32>
    %cst_71 = arith.constant 1.000000e+00 : f32
    %231 = vector.broadcast %cst_71 : f32 to vector<2x128xf32>
    %232 = arith.addf %230, %231 : vector<2x128xf32>
    %cst_72 = arith.constant 2.000000e+00 : f32
    %233 = vector.broadcast %cst_72 : f32 to vector<2x128xf32>
    %234 = arith.addf %232, %233 : vector<2x128xf32>
    %cst_73 = arith.constant 1.000000e+00 : f32
    %235 = vector.broadcast %cst_73 : f32 to vector<2x128xf32>
    %236 = arith.addf %232, %235 : vector<2x128xf32>
    %237 = arith.mulf %232, %236 : vector<2x128xf32>
    %238 = math.log %234 : vector<2x128xf32>
    %239 = math.log %237 : vector<2x128xf32>
    %240 = tpu.reciprocal %234 {approx = true} : vector<2x128xf32> -> vector<2x128xf32>
    %241 = tpu.reciprocal %237 {approx = true} : vector<2x128xf32> -> vector<2x128xf32>
    %242 = arith.mulf %240, %240 : vector<2x128xf32>
    %cst_74 = arith.constant 5.000000e-01 : f32
    %243 = vector.broadcast %cst_74 : f32 to vector<2x128xf32>
    %244 = arith.subf %234, %243 : vector<2x128xf32>
    %245 = arith.mulf %244, %238 : vector<2x128xf32>
    %246 = arith.subf %245, %234 : vector<2x128xf32>
    %cst_75 = arith.constant 0.918938517 : f32
    %247 = vector.broadcast %cst_75 : f32 to vector<2x128xf32>
    %248 = arith.addf %246, %247 : vector<2x128xf32>
    %cst_76 = arith.constant 0.00277777785 : f32
    %249 = vector.broadcast %cst_76 : f32 to vector<2x128xf32>
    %250 = arith.mulf %242, %249 : vector<2x128xf32>
    %cst_77 = arith.constant 0.0833333358 : f32
    %251 = vector.broadcast %cst_77 : f32 to vector<2x128xf32>
    %252 = arith.subf %251, %250 : vector<2x128xf32>
    %253 = arith.mulf %240, %252 : vector<2x128xf32>
    %254 = arith.addf %248, %253 : vector<2x128xf32>
    %255 = arith.subf %254, %239 : vector<2x128xf32>
    %cst_78 = arith.constant 0.00833333377 : f32
    %256 = vector.broadcast %cst_78 : f32 to vector<2x128xf32>
    %257 = arith.mulf %242, %256 : vector<2x128xf32>
    %cst_79 = arith.constant 0.0833333358 : f32
    %258 = vector.broadcast %cst_79 : f32 to vector<2x128xf32>
    %259 = arith.subf %258, %257 : vector<2x128xf32>
    %260 = arith.mulf %240, %259 : vector<2x128xf32>
    %cst_80 = arith.constant 5.000000e-01 : f32
    %261 = vector.broadcast %cst_80 : f32 to vector<2x128xf32>
    %262 = arith.addf %261, %260 : vector<2x128xf32>
    %263 = arith.mulf %240, %262 : vector<2x128xf32>
    %264 = arith.subf %238, %263 : vector<2x128xf32>
    %cst_81 = arith.constant 2.000000e+00 : f32
    %265 = vector.broadcast %cst_81 : f32 to vector<2x128xf32>
    %266 = arith.mulf %265, %232 : vector<2x128xf32>
    %cst_82 = arith.constant 1.000000e+00 : f32
    %267 = vector.broadcast %cst_82 : f32 to vector<2x128xf32>
    %268 = arith.addf %266, %267 : vector<2x128xf32>
    %269 = arith.mulf %268, %241 : vector<2x128xf32>
    %270 = arith.subf %264, %269 : vector<2x128xf32>
    %cst_83 = arith.constant 4.000000e+00 : f32
    %271 = vector.broadcast %cst_83 : f32 to vector<2x128xf32>
    %272 = arith.subf %232, %271 : vector<2x128xf32>
    %273 = arith.mulf %272, %270 : vector<2x128xf32>
    %274 = arith.subf %214, %273 : vector<2x128xf32>
    %275 = arith.addf %274, %255 : vector<2x128xf32>
    %276 = arith.subf %275, %210 : vector<2x128xf32>
    %cst_84 = arith.constant 1.79175949 : f32
    %277 = vector.broadcast %cst_84 : f32 to vector<2x128xf32>
    %278 = arith.subf %276, %277 : vector<2x128xf32>
    %279 = arith.addf %223, %229 : vector<2x128xf32>
    %c0_85 = arith.constant 0 : index
    %280 = memref.load %arg2[%c0_85] : memref<1xf32, #tpu.memory_space<smem>>
    %281 = vector.broadcast %280 : f32 to vector<2x128xf32>
    %282 = arith.mulf %281, %278 : vector<2x128xf32>
    %283 = arith.addf %279, %282 : vector<2x128xf32>
    %c0_i32_86 = arith.constant 0 : i32
    %284 = arith.cmpi eq, %arg1, %c0_i32_86 : i32
    %285 = arith.extui %284 : i1 to i32
    %c0_i32_87 = arith.constant 0 : i32
    %286 = arith.cmpi ne, %285, %c0_i32_87 : i32
    scf.if %286 {
      %cst_94 = arith.constant 0.000000e+00 : f32
      %293 = vector.broadcast %cst_94 : f32 to vector<2x128xf32>
      %c0_95 = arith.constant 0 : index
      %c0_96 = arith.constant 0 : index
      %c0_97 = arith.constant 0 : index
      %294 = vector.load %arg5[%c0_95, %c0_96, %c0_97] : memref<1x2x128xf32, #tpu.memory_space<vmem>>, vector<1x2x128xf32>
      %295 = vector.shape_cast %294 : vector<1x2x128xf32> to vector<2x128xf32>
      %296 = vector.shape_cast %293 : vector<2x128xf32> to vector<1x2x128xf32>
      tpu.vector_store %arg5[%c0_95, %c0_96, %c0_97], %296 {strides = array<i32>} : memref<1x2x128xf32, #tpu.memory_space<vmem>>, vector<1x2x128xf32>,
    } else {
    }
    %c0_88 = arith.constant 0 : index
    %c0_89 = arith.constant 0 : index
    %c0_90 = arith.constant 0 : index
    %287 = vector.load %arg5[%c0_88, %c0_89, %c0_90] : memref<1x2x128xf32, #tpu.memory_space<vmem>>, vector<1x2x128xf32>
    %288 = vector.shape_cast %287 : vector<1x2x128xf32> to vector<2x128xf32>
    %289 = arith.addf %288, %283 : vector<2x128xf32>
    %c0_91 = arith.constant 0 : index
    %c0_92 = arith.constant 0 : index
    %c0_93 = arith.constant 0 : index
    %290 = vector.load %arg5[%c0_91, %c0_92, %c0_93] : memref<1x2x128xf32, #tpu.memory_space<vmem>>, vector<1x2x128xf32>
    %291 = vector.shape_cast %290 : vector<1x2x128xf32> to vector<2x128xf32>
    %292 = vector.shape_cast %289 : vector<2x128xf32> to vector<1x2x128xf32>
    tpu.vector_store %arg5[%c0_91, %c0_92, %c0_93], %292 {strides = array<i32>} : memref<1x2x128xf32, #tpu.memory_space<vmem>>, vector<1x2x128xf32>,
    return
  }
  func.func @transform_0(%arg0: i32, %arg1: i32, %arg2: memref<1xf32, #tpu.memory_space<smem>>) -> (i32, i32, i32, i32) {
    %c0_i32 = arith.constant 0 : i32
    %c0_i32_0 = arith.constant 0 : i32
    %c0_i32_1 = arith.constant 0 : i32
    return %arg0, %c0_i32, %arg1, %c0_i32_0 : i32, i32, i32, i32
  }
  func.func @transform_1(%arg0: i32, %arg1: i32, %arg2: memref<1xf32, #tpu.memory_space<smem>>) -> (i32, i32, i32) {
    %c0_i32 = arith.constant 0 : i32
    %c0_i32_0 = arith.constant 0 : i32
    return %arg0, %arg1, %c0_i32 : i32, i32, i32
  }
  func.func @transform_2(%arg0: i32, %arg1: i32, %arg2: memref<1xf32, #tpu.memory_space<smem>>) -> (i32, i32, i32) {
    %c0_i32 = arith.constant 0 : i32
    %c0_i32_0 = arith.constant 0 : i32
    %c0_i32_1 = arith.constant 0 : i32
    return %arg0, %c0_i32, %c0_i32_0 : i32, i32, i32
  }
}

</mosaic_0001>

<llo_original>
// kernel: tpu_custom_call.1
$region0: #{tpu_custom_call.1}
  #allocation0 [shape = 'u32[]', space=smem, size = 0x4, offset = 0x4, fixed_abs, tag = 'smem constant byte address 0x4 - core index']
  #allocation1 [shape = 'u32[144,128]{1,0:T(1,128)}', space=vmem, size = 0x12000, scoped, tag = 'internal scratch']
  #allocation2 [shape = 's32[1]{0}', space=sflag, size = 0x4, scoped, tag = 'scoped memory for tpu_custom_call.1']
  #allocation3 [shape = 'f32[1]{0:T(128)S(6)}', space=smem, size = 0x200, scoped, tag = 'prefetched SMEM operand 0']
  %s0 = inlined_call_operand.<no memory space> [shape: f32[1], index: 0, kind: input, shape index: {}]
  %s1 = inlined_call_operand.hbm [shape: f32[2,4,2,128], index: 1, kind: input, shape index: {}]
  %s2 = inlined_call_operand.vmem [shape: s32[2,2,128], index: 2, kind: input, shape index: {}]
  %s3 = inlined_call_operand.hbm [shape: f32[2,2,128], index: 3, kind: output, shape index: {}]
  %s4 = sld [smem:[#allocation0]]
  $region49: #{tpu_custom_call.1} parent=0
    _
  %s6 = ssub.s32 1, %s4
  %s7 = scalar_select 0, %s6, %s4
  %8 = sst [smem:[#allocation3]] %s0
  $region1: #{tpu_custom_call.1} parent=0
    #allocation4 [shape = 'u8[8192]{0}', space=vmem, size = 0x2000, scoped, tag = 'input window, operand 1']
    #allocation5 [shape = 's32[2]{0}', space=sflag, size = 0x8, scoped, tag = 'scoped memory for tpu_custom_call.1']
    #allocation6 [shape = 's32[2]{0}', space=sflag, size = 0x8, scoped, tag = 'scoped memory for tpu_custom_call.1']
    #allocation7 [shape = 'u8[2048]{0}', space=vmem, size = 0x800, scoped, tag = 'output window, operand 0']
    %9 = vsyncpa [#allocation5], 0
    %s10 = scalar_lea.sflag [#allocation5], 1
    %11 = vsyncpa %s10, 0
    %12 = vsyncpa [#allocation6], 0
    %s13 = scalar_lea.sflag [#allocation6], 1
    %14 = vsyncpa %s13, 0
    loop: start=0, step=1, limit=4
    $region2: #{tpu_custom_call.1} parent=1 // loop_pre_header
      _
    $region3: #{tpu_custom_call.1} parent=1 // loop_header
      %s16 = sphi 0, %s20
      %p17 = scmp.ge.s32.totalorder %s16, 4
      %s23 = sphi 0, %s35
      %s24 = sphi 0, %s31
      %s25 = sphi 0, %s23
      %s26 = sphi 0, %s24
      %s27 = sphi 0, %s25
      %s28 = sphi 0, %s26
      %s40 = sphi 0, %s42
      %s43 = sphi 0, %s40
      %s44 = sphi 0, %s43
      %s60 = sphi 0, %s44
      %s68 = sphi 0, %s70
      %s71 = sphi 0, %s68
      %s72 = sphi 0, %s71
      %s88 = sphi 0, %s72
      %s94 = sphi 0, %s96
      %s97 = sphi 0, %s94
      %s98 = sphi 0, %s97
      %s114 = sphi 0, %s98
    $region4: #{tpu_custom_call.1} parent=1 // loop_header_branch
      %19 = sbr.rel (%p17) target = $region8
    $region5: #{tpu_custom_call.1} parent=1 // loop_body
      %s21 = ssub.s32 %s16, 1
      %s22 = ssub.s32 %s16, 2
      %s29 = sadd.s32 1, %s24
      %p30 = scmp.ge.s32.totalorder %s29, 1
      %s31 = scalar_select %p30, 0, %s29
      %s32 = sadd.s32 1, %s23
      %s33 = scalar_select %p30, %s32, %s23
      %p34 = scmp.ge.s32.totalorder %s33, 2
      %s35 = scalar_select %p34, 0, %s33
      %s36 = ssub.s32 %s23, %s35
      %s37 = ssub.s32 %s24, %s31
      %s38 = sor.u32 %s36, %s37
      %p39 = scmp.eq.s32.totalorder %s38, 0
      %s41 = sadd.s32 %s40, 1
      %s42 = scalar_select %p39, %s40, %s41
      %p45 = pneg %p39
      %p46 = scmp.eq.s32.totalorder %s16, 1
      %p47 = por %p45, %p46
      %p48 = scmp.ne.s32.totalorder %s40, %s43
      %p49 = scmp.eq.s32.totalorder %s16, 0
      %p50 = por %p48, %p49
      %p51 = scmp.ne.s32.totalorder %s40, %s43
      %p52 = scmp.eq.s32.totalorder %s21, 1
      %p53 = por %p51, %p52
      %p54 = scmp.ne.s32.totalorder %s43, %s44
      %p55 = scmp.eq.s32.totalorder %s21, 0
      %p56 = por %p54, %p55
      %p57 = scmp.ne.s32.totalorder %s43, %s44
      %p58 = scmp.eq.s32.totalorder %s22, 1
      %p59 = por %p57, %p58
      %p61 = scmp.ne.s32.totalorder %s44, %s60
      %p62 = scmp.eq.s32.totalorder %s22, 0
      %p63 = por %p61, %p62
      %s64 = ssub.s32 %s23, %s35
      %s65 = ssub.s32 %s24, %s31
      %s66 = sor.u32 %s64, %s65
      %p67 = scmp.eq.s32.totalorder %s66, 0
      %s69 = sadd.s32 %s68, 1
      %s70 = scalar_select %p67, %s68, %s69
      %p73 = pneg %p67
      %p74 = scmp.eq.s32.totalorder %s16, 1
      %p75 = por %p73, %p74
      %p76 = scmp.ne.s32.totalorder %s68, %s71
      %p77 = scmp.eq.s32.totalorder %s16, 0
      %p78 = por %p76, %p77
      %p79 = scmp.ne.s32.totalorder %s68, %s71
      %p80 = scmp.eq.s32.totalorder %s21, 1
      %p81 = por %p79, %p80
      %p82 = scmp.ne.s32.totalorder %s71, %s72
      %p83 = scmp.eq.s32.totalorder %s21, 0
      %p84 = por %p82, %p83
      %p85 = scmp.ne.s32.totalorder %s71, %s72
      %p86 = scmp.eq.s32.totalorder %s22, 1
      %p87 = por %p85, %p86
      %p89 = scmp.ne.s32.totalorder %s72, %s88
      %p90 = scmp.eq.s32.totalorder %s22, 0
      %p91 = por %p89, %p90
      %s92 = ssub.s32 %s23, %s35
      %p93 = scmp.eq.s32.totalorder %s92, 0
      %s95 = sadd.s32 %s94, 1
      %s96 = scalar_select %p93, %s94, %s95
      %p99 = pneg %p93
      %p100 = scmp.eq.s32.totalorder %s16, 1
      %p101 = por %p99, %p100
      %p102 = scmp.ne.s32.totalorder %s94, %s97
      %p103 = scmp.eq.s32.totalorder %s16, 0
      %p104 = por %p102, %p103
      %p105 = scmp.ne.s32.totalorder %s94, %s97
      %p106 = scmp.eq.s32.totalorder %s21, 1
      %p107 = por %p105, %p106
      %p108 = scmp.ne.s32.totalorder %s97, %s98
      %p109 = scmp.eq.s32.totalorder %s21, 0
      %p110 = por %p108, %p109
      %p111 = scmp.ne.s32.totalorder %s97, %s98
      %p112 = scmp.eq.s32.totalorder %s22, 1
      %p113 = por %p111, %p112
      %p115 = scmp.ne.s32.totalorder %s98, %s114
      %p116 = scmp.eq.s32.totalorder %s22, 0
      %p117 = por %p115, %p116
      %p118 = scmp.le.s32.totalorder 1, %s16
      %p119 = scmp.lt.s32.totalorder %s16, 3
      %p120 = pnand %p118, %p119
      %p121 = pneg %p120
      // Predicated region
      $region9: #{tpu_custom_call.1} parent=5 // pred_check
        _
      $region10: #{tpu_custom_call.1} parent=5 // pred_check_branch
        %123 = sbr.rel (%p120) target = $region12
      $region11: #{tpu_custom_call.1} parent=5 // pred_region
        %s124 = ssub.s32 %s16, 1
      $region12: #{tpu_custom_call.1} parent=5 // pred_fallthru
        _
      %p125 = scmp.lt.s32.totalorder %s16, 2
      // Predicated region
      $region13: #{tpu_custom_call.1} parent=5 // pred_check
        %p126 = pneg %p125
      $region14: #{tpu_custom_call.1} parent=5 // pred_check_branch
        %128 = sbr.rel (%p126) target = $region16
      $region15: #{tpu_custom_call.1} parent=5 // pred_region
        // Predicated region
        $region17: #{tpu_custom_call.1} parent=15 // pred_check
          %p129 = pneg %p50
        $region18: #{tpu_custom_call.1} parent=15 // pred_check_branch
          %131 = sbr.rel (%p129) target = $region20
        $region19: #{tpu_custom_call.1} parent=15 // pred_region
          %s132 = sand.u32 %s40, 1
          %s133 = scalar_lea.sflag [#allocation5], %s132
          %s134 = sand.u32 %s40, 1
          %s135 = smul.addr %s134, 8
          %s136 = scalar_lea.vmem [#allocation4], %s135
          %s138 = ssub.s32 128, 128
          %139 = vsyncadd %s133, %s138
          %s140 = smul.addr %s23, 4
          %s141 = sadd.s32 %s24, %s140
          %s142 = smul.addr %s141, 32
          %s143 = scalar_lea.hbm %s1, %s142
          %s144 = sshll.u32 %s136, 4
          %s145 = int_to_ptr.vmem [resolvable:$true] %s144
          %150 = dma.hbm_to_vmem [thread:$0]  %s143, 128, %s145, %s133, 32, 32, 2
        $region20: #{tpu_custom_call.1} parent=15 // pred_fallthru
          _
        // Predicated region
        $region21: #{tpu_custom_call.1} parent=15 // pred_check
          %p151 = pneg %p78
        $region22: #{tpu_custom_call.1} parent=15 // pred_check_branch
          %153 = sbr.rel (%p151) target = $region24
        $region23: #{tpu_custom_call.1} parent=15 // pred_region
          %p154 = scmp.lt.s32.totalorder %s23, 1
          %s155 = scalar_select %p154, %s23, 1
          %p156 = scmp.lt.s32.totalorder %s24, 0
          %s157 = scalar_select %p156, %s24, 0
          %s158 = sadd.s32 %s157, %s155
          %s159 = smul.addr %s158, 2
          %s160 = scalar_lea.vmem %s2, %s159
        $region24: #{tpu_custom_call.1} parent=15 // pred_fallthru
          _
      $region16: #{tpu_custom_call.1} parent=5 // pred_fallthru
        _
      %p161 = scmp.le.s32.totalorder 1, %s16
      %p162 = scmp.lt.s32.totalorder %s16, 3
      %p163 = pnand %p161, %p162
      %p164 = pneg %p163
      // Predicated region
      $region25: #{tpu_custom_call.1} parent=5 // pred_check
        _
      $region26: #{tpu_custom_call.1} parent=5 // pred_check_branch
        %166 = sbr.rel (%p163) target = $region28
      $region27: #{tpu_custom_call.1} parent=5 // pred_region
        %s167 = ssub.s32 %s16, 1
        %s168 = sand.u32 %s43, 1
        %s169 = scalar_lea.sflag [#allocation5], %s168
        %s170 = sand.u32 %s43, 1
        %s171 = smul.addr %s170, 8
        %s172 = scalar_lea.vmem [#allocation4], %s171
        // Predicated region
        $region29: #{tpu_custom_call.1} parent=27 // pred_check
          %p173 = pneg %p56
        $region30: #{tpu_custom_call.1} parent=27 // pred_check_branch
          %175 = sbr.rel (%p173) target = $region32
        $region31: #{tpu_custom_call.1} parent=27 // pred_region
          %176 = dma.done %s169, 128
        $region32: #{tpu_custom_call.1} parent=27 // pred_fallthru
          _
        %s177 = sand.u32 %s43, 1
        %s178 = scalar_lea.sflag [#allocation5], %s177
        %s179 = sand.u32 %s43, 1
        %s180 = smul.addr %s179, 8
        %s181 = scalar_lea.vmem [#allocation4], %s180
        %p182 = pneg %p56
        %p183 = pneg %p53
        %p184 = scmp.lt.s32.totalorder %s25, 1
        %s185 = scalar_select %p184, %s25, 1
        %p186 = scmp.lt.s32.totalorder %s26, 0
        %s187 = scalar_select %p186, %s26, 0
        %s188 = sadd.s32 %s187, %s185
        %s189 = smul.addr %s188, 2
        %s190 = scalar_lea.vmem %s2, %s189
        %p191 = pneg %p84
        %p192 = pneg %p81
        %p193 = pneg %p110
        %p194 = pneg %p107
        %s195 = sand.u32 %s97, 1
        %s196 = scalar_lea.sflag [#allocation6], %s195
        %s197 = sand.u32 %s97, 1
        %s198 = smul.addr %s197, 2
        %s199 = scalar_lea.vmem [#allocation7], %s198
        %p200 = scmp.lt.s32.totalorder %s25, 1
        %s201 = scalar_select %p200, %s25, 1
        %p202 = scmp.lt.s32.totalorder %s26, 0
        %s203 = scalar_select %p202, %s26, 0
        %s204 = sadd.s32 %s203, %s201
        %s205 = smul.addr %s204, 2
        %s206 = scalar_lea.vmem %s2, %s205
        %v207 = vld [vmem:[%s206] sm:$0x3]
        %v208 = vld [vmem:[%s172] sm:$0x3]
        %v209 = vadd.f32 %v208, 0.0
        %v210 = vmul.f32 %v208, %v208
        %v211 = vadd.f32 %v210, 0.0
        %vm212 = vcmp.eq.s32.totalorder %v207, 0
        %v213 = vsel %vm212, %v208, 0.0
        %v214 = vsel %vm212, 1.0, %v208
        %v215 = vadd.f32 %v214, 2.0
        %v216 = vadd.f32 %v214, 1.0
        %v217 = vmul.f32 %v214, %v216
        %v218 = vlog2.pop %v215
        %v219 = vmul.f32 %v218, 0.6931472
        %v220 = vlog2.pop %v217
        %v221 = vmul.f32 %v220, 0.6931472
        %v222 = vrcp.pop %v215
        %v223 = vrcp.pop %v217
        %v224 = vmul.f32 %v222, %v222
        %v225 = vsub.f32 %v215, 0.5
        %v226 = vmul.f32 %v225, %v219
        %v227 = vsub.f32 %v226, %v215
        %v228 = vadd.f32 %v227, 0.9189385
        %v229 = vmul.f32 %v224, 0.0027777778
        %v230 = vsub.f32 0.083333336, %v229
        %v231 = vmul.f32 %v222, %v230
        %v232 = vadd.f32 %v228, %v231
        %v233 = vsub.f32 %v232, %v221
        %v234 = vmul.f32 %v224, 0.008333334
        %v235 = vsub.f32 0.083333336, %v234
        %v236 = vmul.f32 %v222, %v235
        %v237 = vadd.f32 %v236, 0.5
        %v238 = vmul.f32 %v222, %v237
        %v239 = vsub.f32 %v219, %v238
        %v240 = vmul.f32 %v214, 2.0
        %v241 = vadd.f32 %v240, 1.0
        %v242 = vmul.f32 %v241, %v223
        %v243 = vsub.f32 %v239, %v242
        %v244 = vadd.f32 %v233, 0.0
        %v245 = vsub.f32 %v214, 1.0
        %v246 = vmul.f32 %v245, %v243
        %v247 = vadd.f32 %v246, 0.0
        %s248 = scalar_lea.vmem %s172, 2 [#allocation4]
        %v249 = vld [vmem:[%s248] sm:$0x3]
        %v250 = vadd.f32 %v209, %v249
        %v251 = vmul.f32 %v249, %v249
        %v252 = vadd.f32 %v211, %v251
        %vm253 = vcmp.eq.s32.totalorder %v207, 1
        %v254 = vsel %vm253, %v249, %v213
        %v255 = vsel %vm253, 1.0, %v249
        %v256 = vadd.f32 %v255, 2.0
        %v257 = vadd.f32 %v255, 1.0
        %v258 = vmul.f32 %v255, %v257
        %v259 = vlog2.pop %v256
        %v260 = vmul.f32 %v259, 0.6931472
        %v261 = vlog2.pop %v258
        %v262 = vmul.f32 %v261, 0.6931472
        %v263 = vrcp.pop %v256
        %v264 = vrcp.pop %v258
        %v265 = vmul.f32 %v263, %v263
        %v266 = vsub.f32 %v256, 0.5
        %v267 = vmul.f32 %v266, %v260
        %v268 = vsub.f32 %v267, %v256
        %v269 = vadd.f32 %v268, 0.9189385
        %v270 = vmul.f32 %v265, 0.0027777778
        %v271 = vsub.f32 0.083333336, %v270
        %v272 = vmul.f32 %v263, %v271
        %v273 = vadd.f32 %v269, %v272
        %v274 = vsub.f32 %v273, %v262
        %v275 = vmul.f32 %v265, 0.008333334
        %v276 = vsub.f32 0.083333336, %v275
        %v277 = vmul.f32 %v263, %v276
        %v278 = vadd.f32 %v277, 0.5
        %v279 = vmul.f32 %v263, %v278
        %v280 = vsub.f32 %v260, %v279
        %v281 = vmul.f32 %v255, 2.0
        %v282 = vadd.f32 %v281, 1.0
        %v283 = vmul.f32 %v282, %v264
        %v284 = vsub.f32 %v280, %v283
        %v285 = vadd.f32 %v244, %v274
        %v286 = vsub.f32 %v255, 1.0
        %v287 = vmul.f32 %v286, %v284
        %v288 = vadd.f32 %v247, %v287
        %s289 = scalar_lea.vmem %s172, 4 [#allocation4]
        %v290 = vld [vmem:[%s289] sm:$0x3]
        %v291 = vadd.f32 %v250, %v290
        %v292 = vmul.f32 %v290, %v290
        %v293 = vadd.f32 %v252, %v292
        %vm294 = vcmp.eq.s32.totalorder %v207, 2
        %v295 = vsel %vm294, %v290, %v254
        %v296 = vsel %vm294, 1.0, %v290
        %v297 = vadd.f32 %v296, 2.0
        %v298 = vadd.f32 %v296, 1.0
        %v299 = vmul.f32 %v296, %v298
        %v300 = vlog2.pop %v297
        %v301 = vmul.f32 %v300, 0.6931472
        %v302 = vlog2.pop %v299
        %v303 = vmul.f32 %v302, 0.6931472
        %v304 = vrcp.pop %v297
        %v305 = vrcp.pop %v299
        %v306 = vmul.f32 %v304, %v304
        %v307 = vsub.f32 %v297, 0.5
        %v308 = vmul.f32 %v307, %v301
        %v309 = vsub.f32 %v308, %v297
        %v310 = vadd.f32 %v309, 0.9189385
        %v311 = vmul.f32 %v306, 0.0027777778
        %v312 = vsub.f32 0.083333336, %v311
        %v313 = vmul.f32 %v304, %v312
        %v314 = vadd.f32 %v310, %v313
        %v315 = vsub.f32 %v314, %v303
        %v316 = vmul.f32 %v306, 0.008333334
        %v317 = vsub.f32 0.083333336, %v316
        %v318 = vmul.f32 %v304, %v317
        %v319 = vadd.f32 %v318, 0.5
        %v320 = vmul.f32 %v304, %v319
        %v321 = vsub.f32 %v301, %v320
        %v322 = vmul.f32 %v296, 2.0
        %v323 = vadd.f32 %v322, 1.0
        %v324 = vmul.f32 %v323, %v305
        %v325 = vsub.f32 %v321, %v324
        %v326 = vadd.f32 %v285, %v315
        %v327 = vsub.f32 %v296, 1.0
        %v328 = vmul.f32 %v327, %v325
        %v329 = vadd.f32 %v288, %v328
        %s330 = scalar_lea.vmem %s172, 6 [#allocation4]
        %v331 = vld [vmem:[%s330] sm:$0x3]
        %v332 = vadd.f32 %v291, %v331
        %v333 = vmul.f32 %v331, %v331
        %v334 = vadd.f32 %v293, %v333
        %vm335 = vcmp.eq.s32.totalorder %v207, 3
        %v336 = vsel %vm335, %v331, %v295
        %v337 = vsel %vm335, 1.0, %v331
        %v338 = vadd.f32 %v337, 2.0
        %v339 = vadd.f32 %v337, 1.0
        %v340 = vmul.f32 %v337, %v339
        %v341 = vlog2.pop %v338
        %v342 = vmul.f32 %v341, 0.6931472
        %v343 = vlog2.pop %v340
        %v344 = vmul.f32 %v343, 0.6931472
        %v345 = vrcp.pop %v338
        %v346 = vrcp.pop %v340
        %v347 = vmul.f32 %v345, %v345
        %v348 = vsub.f32 %v338, 0.5
        %v349 = vmul.f32 %v348, %v342
        %v350 = vsub.f32 %v349, %v338
        %v351 = vadd.f32 %v350, 0.9189385
        %v352 = vmul.f32 %v347, 0.0027777778
        %v353 = vsub.f32 0.083333336, %v352
        %v354 = vmul.f32 %v345, %v353
        %v355 = vadd.f32 %v351, %v354
        %v356 = vsub.f32 %v355, %v344
        %v357 = vmul.f32 %v347, 0.008333334
        %v358 = vsub.f32 0.083333336, %v357
        %v359 = vmul.f32 %v345, %v358
        %v360 = vadd.f32 %v359, 0.5
        %v361 = vmul.f32 %v345, %v360
        %v362 = vsub.f32 %v342, %v361
        %v363 = vmul.f32 %v337, 2.0
        %v364 = vadd.f32 %v363, 1.0
        %v365 = vmul.f32 %v364, %v346
        %v366 = vsub.f32 %v362, %v365
        %v367 = vadd.f32 %v326, %v356
        %v368 = vsub.f32 %v337, 1.0
        %v369 = vmul.f32 %v368, %v366
        %v370 = vadd.f32 %v329, %v369
        %v371 = vrcp.pop %v332
        %v372 = vmul.f32 %v371, %v371
        %v373 = vmul.f32 %v334, %v372
        %v374 = vmul.f32 %v336, 2.0
        %v375 = vmul.f32 %v374, %v371
        %v376 = vsub.f32 1.0, %v375
        %v377 = vadd.f32 %v376, %v373
        %v378 = vsub.f32 1.0, %v373
        %v379 = vadd.f32 %v332, 1.0
        %v380 = vrcp.pop %v379
        %v381 = vmul.f32 %v378, %v380
        %v382 = vsub.f32 %v332, %v336
        %v383 = vadd.f32 %v382, 1.0
        %v384 = vadd.f32 %v383, 2.0
        %v385 = vadd.f32 %v383, 1.0
        %v386 = vmul.f32 %v383, %v385
        %v387 = vlog2.pop %v384
        %v388 = vmul.f32 %v387, 0.6931472
        %v389 = vlog2.pop %v386
        %v390 = vmul.f32 %v389, 0.6931472
        %v391 = vrcp.pop %v384
        %v392 = vrcp.pop %v386
        %v393 = vmul.f32 %v391, %v391
        %v394 = vsub.f32 %v384, 0.5
        %v395 = vmul.f32 %v394, %v388
        %v396 = vsub.f32 %v395, %v384
        %v397 = vadd.f32 %v396, 0.9189385
        %v398 = vmul.f32 %v393, 0.0027777778
        %v399 = vsub.f32 0.083333336, %v398
        %v400 = vmul.f32 %v391, %v399
        %v401 = vadd.f32 %v397, %v400
        %v402 = vsub.f32 %v401, %v390
        %v403 = vmul.f32 %v393, 0.008333334
        %v404 = vsub.f32 0.083333336, %v403
        %v405 = vmul.f32 %v391, %v404
        %v406 = vadd.f32 %v405, 0.5
        %v407 = vmul.f32 %v391, %v406
        %v408 = vsub.f32 %v388, %v407
        %v409 = vmul.f32 %v383, 2.0
        %v410 = vadd.f32 %v409, 1.0
        %v411 = vmul.f32 %v410, %v392
        %v412 = vsub.f32 %v408, %v411
        %v413 = vsub.f32 %v383, 4.0
        %v414 = vmul.f32 %v413, %v412
        %v415 = vsub.f32 %v370, %v414
        %v416 = vadd.f32 %v415, %v402
        %v417 = vsub.f32 %v416, %v367
        %v418 = vsub.f32 %v417, 1.7917595
        %v419 = vadd.f32 %v377, %v381
        %s420 = sld [smem:[#allocation3]]
        %v421 = vstv %s420
        %v422 = vmul.f32 %v421, %v418
        %v423 = vadd.f32 %v419, %v422
        %p424 = scmp.eq.s32.totalorder %s26, 0
        // Predicated region
        $region33: #{tpu_custom_call.1} parent=27 // pred_check
          %p425 = pneg %p424
        $region34: #{tpu_custom_call.1} parent=27 // pred_check_branch
          %427 = sbr.rel (%p425) target = $region36
        $region35: #{tpu_custom_call.1} parent=27 // pred_region
          %428 = vst [vmem:[%s199] sm:$0x3] 0.0
        $region36: #{tpu_custom_call.1} parent=27 // pred_fallthru
          _
        %v429 = vld [vmem:[%s199] sm:$0x3]
        %v430 = vadd.f32 %v429, %v423
        %431 = vst [vmem:[%s199] sm:$0x3] %v430
        %s432 = sand.u32 %s97, 1
        %s433 = scalar_lea.sflag [#allocation6], %s432
        %s434 = sand.u32 %s97, 1
        %s435 = smul.addr %s434, 2
        %s436 = scalar_lea.vmem [#allocation7], %s435
        // Predicated region
        $region37: #{tpu_custom_call.1} parent=27 // pred_check
          %p437 = pneg %p107
        $region38: #{tpu_custom_call.1} parent=27 // pred_check_branch
          %439 = sbr.rel (%p437) target = $region40
        $region39: #{tpu_custom_call.1} parent=27 // pred_region
          %s441 = ssub.s32 32, 32
          %442 = vsyncadd %s433, %s441
          %s443 = smul.addr %s25, 32
          %s444 = scalar_lea.hbm %s3, %s443
          %s446 = sshll.u32 %s436, 4
          %s447 = int_to_ptr.vmem [resolvable:$true] %s446
          %449 = dma.vmem_to_hbm [thread:$0]  %s447, 32, %s444, %s433
        $region40: #{tpu_custom_call.1} parent=27 // pred_fallthru
          _
      $region28: #{tpu_custom_call.1} parent=5 // pred_fallthru
        _
      %p450 = scmp.le.s32.totalorder 2, %s16
      // Predicated region
      $region41: #{tpu_custom_call.1} parent=5 // pred_check
        %p451 = pneg %p450
      $region42: #{tpu_custom_call.1} parent=5 // pred_check_branch
        %453 = sbr.rel (%p451) target = $region44
      $region43: #{tpu_custom_call.1} parent=5 // pred_region
        %s454 = ssub.s32 %s16, 2
        // Predicated region
        $region45: #{tpu_custom_call.1} parent=43 // pred_check
          %p455 = pneg %p113
        $region46: #{tpu_custom_call.1} parent=43 // pred_check_branch
          %457 = sbr.rel (%p455) target = $region48
        $region47: #{tpu_custom_call.1} parent=43 // pred_region
          %s458 = sand.u32 %s98, 1
          %s459 = scalar_lea.sflag [#allocation6], %s458
          %s460 = sand.u32 %s98, 1
          %s461 = smul.addr %s460, 2
          %s462 = scalar_lea.vmem [#allocation7], %s461
          %463 = dma.done %s459, 32
        $region48: #{tpu_custom_call.1} parent=43 // pred_fallthru
          _
      $region44: #{tpu_custom_call.1} parent=5 // pred_fallthru
        _
    $region6: #{tpu_custom_call.1} parent=1 // loop_footer
      %s20 = sadd.s32 1, %s16
    $region7: #{tpu_custom_call.1} parent=1 // loop_footer_branch
      %15 = sbr.rel target = $region3
    $region8: #{tpu_custom_call.1} parent=1 // loop_exit
      _
    %464 = vsyncpa [#allocation5], 1
    %s465 = scalar_lea.sflag [#allocation5], 1
    %466 = vsyncpa %s465, 1
    %467 = vsyncpa [#allocation6], 1
    %s468 = scalar_lea.sflag [#allocation6], 1
    %469 = vsyncpa %s468, 1

</llo_original>
